<compile_context>
chip_gen: v7x
topology: tpu7x:2x2x1
jax: 0.10.0
libtpu: 0.0.40
codegen_flags: <defaults>
</compile_context>

<pallas_src>
import jax
import jax.numpy as jnp
from jax.experimental import pallas as pl
from jax.experimental.pallas import tpu as pltpu


def _fused_linear_sub_kernel(x_ref, w_ref, out_ref):
    # x_ref:   (tile_M, K+1)  rows = flattened (B*S), last column is -1.0
    # w_ref:   (K+1, N)       pre-transposed weight, last row is `other`
    # out_ref: (tile_M, N)
    out_ref[...] = jnp.dot(
        x_ref[...], w_ref[...], preferred_element_type=jnp.float32
    ).astype(out_ref.dtype)


def linear_sub(x, weight, other_vec, *, tile_m=512):
    """x: (B, S, K) f32; weight: (N, K) f32 (PyTorch layout); other_vec: (N,) f32.

    Returns (B, S, N) = x @ weight.T - other_vec.
    """
    B, S, K = x.shape
    N = weight.shape[0]
    M = B * S
    Ka = K + 1

    # Wrapper-side (XLA) prep — done once, essentially free:
    #   x_aug = [x | -1],  w_aug = [weight^T ; other_vec]
    # so that x_aug @ w_aug == x @ weight^T - other_vec.
    x2d = x.reshape(M, K)
    x_aug = jnp.concatenate([x2d, jnp.full((M, 1), -1.0, x2d.dtype)], axis=1)
    w_aug = jnp.concatenate(
        [weight.T.astype(jnp.float32), other_vec.reshape(1, N).astype(jnp.float32)],
        axis=0,
    )

    if M <= tile_m:
        # Small-M path: single block, no grid (grid steps would be pure overhead).
        out2d = pl.pallas_call(
            _fused_linear_sub_kernel,
            out_shape=jax.ShapeDtypeStruct((M, N), jnp.float32),
            in_specs=[
                pl.BlockSpec((M, Ka), lambda: (0, 0)),
                pl.BlockSpec((Ka, N), lambda: (0, 0)),
            ],
            out_specs=pl.BlockSpec((M, N), lambda: (0, 0)),
            cost_estimate=pl.CostEstimate(
                flops=2 * M * Ka * N,
                transcendentals=0,
                bytes_accessed=4 * (M * Ka + Ka * N + M * N),
            ),
        )(x_aug, w_aug)
        return out2d.reshape(B, S, N)

    # Large-M path: 1-D grid over rows, "parallel" so v7x can split across 2 TCs.
    num_tiles = pl.cdiv(M, tile_m)
    Mp = num_tiles * tile_m
    if Mp != M:
        x_aug = jnp.pad(x_aug, ((0, Mp - M), (0, 0)))

    out2d = pl.pallas_call(
        _fused_linear_sub_kernel,
        out_shape=jax.ShapeDtypeStruct((Mp, N), jnp.float32),
        grid=(num_tiles,),
        in_specs=[
            pl.BlockSpec((tile_m, Ka), lambda i: (i, 0)),
            pl.BlockSpec((Ka, N), lambda i: (0, 0)),
        ],
        out_specs=pl.BlockSpec((tile_m, N), lambda i: (i, 0)),
        compiler_params=pltpu.CompilerParams(dimension_semantics=("parallel",)),
        cost_estimate=pl.CostEstimate(
            flops=2 * Mp * Ka * N,
            transcendentals=0,
            bytes_accessed=4 * (Mp * Ka + Ka * N + Mp * N),
        ),
    )(x_aug, w_aug)
    return out2d[:M].reshape(B, S, N)


def reference(x, weight, other_vec):
    return jnp.einsum("bsk,nk->bsn", x, weight) - other_vec.reshape(1, 1, -1)


if __name__ == "__main__":
    key = jax.random.PRNGKey(0)
    kx, kw = jax.random.split(key)

    # Shapes implied by the module: Linear(16, 8) -> K=16, N=8; batch 1, seq 16.
    B, S, K, N = 1, 16, 16, 8

    x = jax.random.normal(kx, (B, S, K), dtype=jnp.float32)

    # Linear(16, 8, bias=False) weight, PyTorch-style uniform(-1/sqrt(K), 1/sqrt(K))
    bound = 1.0 / jnp.sqrt(jnp.float32(K))
    weight = jax.random.uniform(
        kw, (N, K), dtype=jnp.float32, minval=-bound, maxval=bound
    )

    # self.other = tensor([1..8]).float().view(1, 2, 4) -> flattened to 8 values
    other = jnp.arange(1, 9, dtype=jnp.float32).reshape(1, 2, 4)
    other_vec = other.reshape(-1)  # (8,)

    out = linear_sub(x, weight, other_vec)
    out = jax.block_until_ready(out)

    ref = reference(x, weight, other_vec)
    assert out.shape == (B, S, N)
    assert jnp.allclose(out, ref, atol=1e-5, rtol=1e-5), "mismatch vs reference"

    print("KERNEL_OK")
</pallas_src>

<mosaic_0001>
module attributes {stable_mosaic.version = 11 : i64} {
  func.func @_fused_linear_sub_kernel(%arg0: memref<16x17xf32, #tpu.memory_space<vmem>>, %arg1: memref<17x8xf32, #tpu.memory_space<vmem>>, %arg2: memref<16x8xf32, #tpu.memory_space<vmem>>) attributes {dimension_semantics = [], scalar_prefetch = 0 : i64, scratch_operands = 0 : i64, tpu.core_type = #tpu.core_type<tc>} {
    %c0 = arith.constant 0 : index
    %c0_0 = arith.constant 0 : index
    %0 = vector.load %arg0[%c0, %c0_0] : memref<16x17xf32, #tpu.memory_space<vmem>>, vector<16x17xf32>
    %c0_1 = arith.constant 0 : index
    %c0_2 = arith.constant 0 : index
    %1 = vector.load %arg1[%c0_1, %c0_2] : memref<17x8xf32, #tpu.memory_space<vmem>>, vector<17x8xf32>
    %cst = arith.constant dense<0.000000e+00> : vector<16x8xf32>
    %2 = tpu.matmul %0, %1, %cst {dimension_numbers = #tpu.dot_dimension_numbers<[1], [0], [0], [1], [0, 0, 1, 1], [], []>} : vector<16x17xf32>, vector<17x8xf32>, vector<16x8xf32> -> vector<16x8xf32>
    %c0_3 = arith.constant 0 : index
    %c0_4 = arith.constant 0 : index
    %3 = vector.load %arg2[%c0_3, %c0_4] : memref<16x8xf32, #tpu.memory_space<vmem>>, vector<16x8xf32>
    tpu.vector_store %arg2[%c0_3, %c0_4], %2 {strides = array<i32>} : memref<16x8xf32, #tpu.memory_space<vmem>>, vector<16x8xf32>,
    return
  }
}

</mosaic_0001>

<llo_original>
// kernel: tpu_custom_call.1
$region0: #{tpu_custom_call.1}
  #allocation0 [shape = 'u32[]', space=smem, size = 0x4, offset = 0x4, fixed_abs, tag = 'smem constant byte address 0x4 - core index']
  #allocation1 [shape = 'u32[144,128]{1,0:T(1,128)}', space=vmem, size = 0x12000, scoped, tag = 'internal scratch']
  %s0 = inlined_call_operand.vmem [shape: f32[16,17], index: 0, kind: input, shape index: {}]
  %s1 = inlined_call_operand.vmem [shape: f32[17,8], index: 1, kind: input, shape index: {}]
  %s2 = inlined_call_operand.vmem [shape: f32[16,8], index: 2, kind: output, shape index: {}]
  %s3 = sld [smem:[#allocation0]]
  $region18: #{tpu_custom_call.1} parent=0
    _
  %s5 = ssub.s32 1, %s3
  %s6 = scalar_select 0, %s5, %s3
  // Predicated region
  $region2: #{tpu_custom_call.1} parent=0 // pred_check
    _
  $region3: #{tpu_custom_call.1} parent=0 // pred_check_branch
    %8 = sbr.rel (0) target = $region5
  $region4: #{tpu_custom_call.1} parent=0 // pred_region
    _
  $region5: #{tpu_custom_call.1} parent=0 // pred_fallthru
    _
  // Predicated region
  $region6: #{tpu_custom_call.1} parent=0 // pred_check
    _
  $region7: #{tpu_custom_call.1} parent=0 // pred_check_branch
    %10 = sbr.rel (0) target = $region9
  $region8: #{tpu_custom_call.1} parent=0 // pred_region
    _
  $region9: #{tpu_custom_call.1} parent=0 // pred_fallthru
    _
  %v11 = vld [vmem:[%s0] sm:$0xff]
  %v12 = vld [vmem:[%s0 + $0x8] sm:$0xff]
  %v13 = vld [vmem:[%s1] sm:$0xff]
  %v14 = vld [vmem:[%s1 + $0x8] sm:$0xff]
  %v15 = vld [vmem:[%s1 + $0x10] sm:$0x1]
  %vm16 = vcmask 138240
  %v18 = vsel %vm16, %v11, 0
  %v21 = vsel %vm16, %v12, 0
  %vm23 = vcmask 1040384
  %v25 = vsel %vm23, %v15, 0
  %27 = vmatprep.subr.mxu0 0.0
  %28 = vmatpush1.msra.mxu0 %v13
  %29 = vmatprep.subr.mxu0 0.0
  %30 = vmatpush1.msra.mxu0 %v14
  %31 = vmatprep.subr.mxu0 0.0
  %32 = vmatpush1.msra.mxu0 %v25
  %33 = vmatprep.subr.mxu0 0.0
  %34 = vmatpush1.msra.mxu0 0.0
  %35 = vmatprep.subr.mxu0 0.0
  %36 = vmatpush1.msra.mxu0 0.0
  %37 = vmatprep.subr.mxu0 0.0
  %38 = vmatpush1.msra.mxu0 0.0
  %39 = vmatprep.subr.mxu0 0.0
  %40 = vmatpush1.msra.mxu0 0.0
  %41 = vmatprep.subr.mxu0 0.0
  %42 = vmatpush1.msra.mxu0 0.0
  %43 = vmatprep.subr.mxu0 0.0
  %44 = vmatpush1.msra.mxu0 0.0
  %45 = vmatprep.subr.mxu0 0.0
  %46 = vmatpush1.msra.mxu0 0.0
  %47 = vmatprep.subr.mxu0 0.0
  %48 = vmatpush1.msra.mxu0 0.0
  %49 = vmatprep.subr.mxu0 0.0
  %50 = vmatpush1.msra.mxu0 0.0
  %51 = vmatprep.subr.mxu0 0.0
  %52 = vmatpush1.msra.mxu0 0.0
  %53 = vmatprep.subr.mxu0 0.0
  %54 = vmatpush1.msra.mxu0 0.0
  %55 = vmatprep.subr.mxu0 0.0
  %56 = vmatpush1.msra.mxu0 0.0
  %57 = vmatprep.subr.mxu0 0.0
  %58 = vmatpush1.msra.mxu0 0.0
  %59 = vmatprep.subr.mxu0 0.0
  %60 = vmatpush1.msra.mxu0 0.0
  %61 = vmatprep.subr.mxu0 0.0
  %62 = vmatpush1.msra.mxu0 0.0
  %63 = vmatprep.subr.mxu0 0.0
  %64 = vmatpush1.msra.mxu0 0.0
  %65 = vmatprep.subr.mxu0 0.0
  %66 = vmatpush1.msra.mxu0 0.0
  %67 = vmatprep.subr.mxu0 0.0
  %68 = vmatpush1.msra.mxu0 0.0
  %69 = vmatprep.subr.mxu0 0.0
  %70 = vmatpush1.msra.mxu0 0.0
  %71 = vmatprep.subr.mxu0 0.0
  %72 = vmatpush1.msra.mxu0 0.0
  %73 = vmatprep.subr.mxu0 0.0
  %74 = vmatpush1.msra.mxu0 0.0
  %75 = vmatprep.subr.mxu0 0.0
  %76 = vmatpush1.msra.mxu0 0.0
  %77 = vmatprep.subr.mxu0 0.0
  %78 = vmatpush1.msra.mxu0 0.0
  %79 = vmatprep.subr.mxu0 0.0
  %80 = vmatpush1.msra.mxu0 0.0
  %81 = vmatprep.subr.mxu0 0.0
  %82 = vmatpush1.msra.mxu0 0.0
  %83 = vmatprep.subr.mxu0 0.0
  %84 = vmatpush1.msra.mxu0 0.0
  %85 = vmatprep.subr.mxu0 0.0
  %86 = vmatpush1.msra.mxu0 0.0
  %87 = vmatprep.subr.mxu0 0.0
  %88 = vmatpush1.msra.mxu0 0.0
  %89 = vmatprep.subr.mxu0 0.0
  %90 = vmatpush1.msra.mxu0 0.0
  %91 = vmatprep.mubr.f32.mxu0 0.0
  %92 = vmatmul.mubr.f32.gmra.mrb[0].mxu0 %v18
  %v93 = vpop.f32.mrb[0].mxu0
  %v94 = vadd.f32 0.0, %v93
  %v95 = vpop.f32.mrb[0].mxu0
  %96 = vmatprep.mubr.f32.mxu0 0.0
  %97 = vmatmul.mubr.f32.gmra.mrb[0].mxu0 %v21
  %v98 = vpop.f32.mrb[0].mxu0
  %v99 = vadd.f32 0.0, %v98
  %v100 = vpop.f32.mrb[0].mxu0
  %101 = vdwg.mxu0
  %vm102 = vcmask 64512
  %103 = vst.msk [vmem:[%s2] sm:$0xff] %vm102, %v94
  %104 = vst.msk [vmem:[%s2 + $0x8] sm:$0xff] %vm102, %v99
  // Predicated region
  $region10: #{tpu_custom_call.1} parent=0 // pred_check
    _
  $region11: #{tpu_custom_call.1} parent=0 // pred_check_branch
    %106 = sbr.rel (0) target = $region13
  $region12: #{tpu_custom_call.1} parent=0 // pred_region
    _
  $region13: #{tpu_custom_call.1} parent=0 // pred_fallthru
    _
  // Predicated region
  $region14: #{tpu_custom_call.1} parent=0 // pred_check
    _
  $region15: #{tpu_custom_call.1} parent=0 // pred_check_branch
    %108 = sbr.rel (0) target = $region17
  $region16: #{tpu_custom_call.1} parent=0 // pred_region
    _
  $region17: #{tpu_custom_call.1} parent=0 // pred_fallthru
    _

</llo_original>
